<compile_context>
chip_gen: v7x
topology: tpu7x:2x2x1
jax: 0.10.0
libtpu: 0.0.40
codegen_flags: <defaults>
</compile_context>

<pallas_src>
import functools

import jax
import jax.numpy as jnp
from jax.experimental import pallas as pl
from jax.experimental.pallas import tpu as pltpu


def _ddpm_kernel(sa_ref,     # VMEM (1, N)  sqrt(alpha_t), batch-folded lane row
                 so_ref,     # VMEM (1, N)  sqrt(1 - alpha_t)
                 x_ref,      # VMEM (C, N)  x folded as (C, B*HW) (+ lane pad)
                 eps_ref,    # VMEM (C, N)  eps folded the same way
                 w1t_ref,    # VMEM (Hd, C) = W1^T
                 bcond_ref,  # VMEM (Hd, N) = b1 + (t/n_T)*wt time-conditioned bias slab
                 w2t_ref,    # VMEM (C, Hd) = W2^T
                 b2_ref,     # VMEM (C, 1)
                 mask_ref,   # VMEM (1, N) valid-lane mask ((1,1) dummy when unused)
                 loss_ref,   # SMEM (1, 1) scalar output
                 *, channels, total_elems, use_mask):
    x = x_ref[...]                                       # (C, N)
    eps = eps_ref[...]                                   # (C, N)
    w1t = w1t_ref[...]                                   # (Hd, C)

    # Diffusion forward noising for the whole (folded) batch in one shot:
    # z_t = sqrt(a) * x + sqrt(1 - a) * eps
    z = sa_ref[...] * x + so_ref[...] * eps              # (C, N)

    # Layer 1: K = C = 4 contraction as 4 VPU broadcast-FMAs (outer products),
    # accumulated directly onto the hoisted time-conditioned bias slab.
    h = bcond_ref[...]                                   # (Hd, N), loaded once
    for c in range(channels):
        h = h + w1t[:, c:c + 1] * z[c:c + 1, :]          # (Hd,1)*(1,N) -> (Hd,N)
    h = jnp.maximum(h, 0.0)

    # Layer 2: K = Hd = 32, N lane-dense (>= 256) -> single MXU matmul.
    pred = jnp.dot(w2t_ref[...], h,
                   preferred_element_type=jnp.float32) + b2_ref[...]   # (C, N)

    d = pred - eps
    if use_mask:                                          # static; off at N % 128 == 0
        d = d * mask_ref[...]
    # Single vector accumulator -> exactly one XLU reduce + scalar store (SMEM).
    loss_ref[0, 0] = jnp.sum(d * d) / total_elems


def ddpm_forward_pallas(x_nchw, eps_nchw, t, alpha_t, n_T, params):
    """x_nchw, eps_nchw: (B, C, H, W) float32; t: (B,) int32."""
    B, C, H, W = x_nchw.shape
    HW = H * W
    N = B * HW
    W1, b1, wt, W2, b2 = params             # (C,Hd), (Hd,), (Hd,), (Hd,C), (C,)
    Hd = W1.shape[1]

    # Fold the batch onto the lane axis: (B, C, HW) -> (C, B*HW).
    # One tiny (~8 KB) wrapper transpose per tensor; buys a single matmul pair,
    # a single bias/ReLU sweep and a single MSE reduction inside the kernel.
    x2 = x_nchw.reshape(B, C, HW).transpose(1, 0, 2).reshape(C, N)
    eps2 = eps_nchw.reshape(B, C, HW).transpose(1, 0, 2).reshape(C, N)

    a = alpha_t[t].astype(jnp.float32)                              # (B,)
    sa = jnp.repeat(jnp.sqrt(a), HW)[None, :]                       # (1, N)
    so = jnp.repeat(jnp.sqrt(1.0 - a), HW)[None, :]                 # (1, N)

    # Hoisted time-conditioned bias, expanded to a lane-dense (Hd, N) slab.
    t_norm = t.astype(jnp.float32) / float(n_T)                     # (B,)
    bcond_hb = b1[:, None] + wt[:, None] * t_norm[None, :]          # (Hd, B)
    bcond = jnp.repeat(bcond_hb, HW, axis=1)                        # (Hd, N)

    w1t = W1.T                                                      # (Hd, C)
    w2t = W2.T                                                      # (C, Hd)
    b2c = b2[:, None]                                               # (C, 1)

    # Lane-density guard: pad the folded axis to a multiple of 128 and mask the
    # padded columns out of the MSE. No-op for H*W = 256, B = 2 (N = 512).
    pad = (-N) % 128
    use_mask = pad > 0
    if use_mask:
        padc = ((0, 0), (0, pad))
        x2 = jnp.pad(x2, padc)
        eps2 = jnp.pad(eps2, padc)
        sa = jnp.pad(sa, padc)
        so = jnp.pad(so, padc)
        bcond = jnp.pad(bcond, padc)
        mask = jnp.pad(jnp.ones((1, N), jnp.float32), padc)
    else:
        mask = jnp.ones((1, 1), jnp.float32)    # unread dummy

    Np = N + pad
    total_elems = float(B * C * HW)
    kernel = functools.partial(_ddpm_kernel, channels=C,
                               total_elems=total_elems, use_mask=use_mask)

    # Advisory cost hint for XLA scheduling of the surrounding graph.
    flops = int(2 * C * Hd * Np      # layer-1 FMAs
                + 2 * Hd * C * Np    # layer-2 matmul
                + 10 * C * Np)       # noising, bias, relu, mse
    bytes_accessed = int(4 * (2 * C * Np + 2 * Np + Hd * Np
                              + 2 * C * Hd + C + 1))

    vmem = pl.BlockSpec(memory_space=pltpu.MemorySpace.VMEM)
    loss = pl.pallas_call(
        kernel,
        out_shape=jax.ShapeDtypeStruct((1, 1), jnp.float32),
        in_specs=[vmem] * 9,
        out_specs=pl.BlockSpec(memory_space=pltpu.MemorySpace.SMEM),
        cost_estimate=pl.CostEstimate(
            flops=flops, transcendentals=0, bytes_accessed=bytes_accessed),
    )(sa, so, x2, eps2, w1t, bcond, w2t, b2c, mask)
    return loss[0, 0]


def ddpm_forward_ref(x, eps, t, alpha_t, n_T, params):
    """Pure-JAX reference mirroring the PyTorch forward (with synthetic decoder)."""
    B, C, H, W = x.shape
    W1, b1, wt, W2, b2 = params
    a = alpha_t[t].reshape(B, 1, 1, 1)
    z = jnp.sqrt(a) * x + jnp.sqrt(1.0 - a) * eps
    t_norm = t.astype(jnp.float32) / n_T
    zf = z.reshape(B, C, H * W)
    h = (jnp.einsum('bcl,ch->bhl', zf, W1)
         + b1[None, :, None] + t_norm[:, None, None] * wt[None, :, None])
    h = jnp.maximum(h, 0.0)
    pred = jnp.einsum('bhl,hc->bcl', h, W2) + b2[None, :, None]
    epsf = eps.reshape(B, C, H * W)
    return jnp.mean((pred - epsf) ** 2)


if __name__ == "__main__":
    B, C, H, W = 2, 4, 16, 16
    Hd = 32          # decoder hidden channels
    n_T = 10         # number of diffusion steps

    key = jax.random.PRNGKey(0)
    k_x, k_t, k_eps, k_w1, k_wt, k_w2 = jax.random.split(key, 6)

    # Diffusion schedule buffers (deterministic).
    beta_t = jnp.linspace(1e-4, 2e-2, n_T, dtype=jnp.float32)
    alpha_t = jnp.cumprod(1.0 - beta_t)

    # Input, timestep, noise (deterministic via PRNGKey(0)).
    x = jax.random.normal(k_x, (B, C, H, W), dtype=jnp.float32)
    t = jax.random.randint(k_t, (B,), 1, n_T, dtype=jnp.int32)
    eps = jax.random.normal(k_eps, (B, C, H, W), dtype=jnp.float32)

    # Deterministic synthetic decoder parameters (two 1x1 convs + time cond.).
    W1 = jax.random.normal(k_w1, (C, Hd), dtype=jnp.float32) * 0.2
    b1 = jnp.zeros((Hd,), dtype=jnp.float32)
    wt = jax.random.normal(k_wt, (Hd,), dtype=jnp.float32) * 0.2
    W2 = jax.random.normal(k_w2, (Hd, C), dtype=jnp.float32) * 0.2
    b2 = jnp.zeros((C,), dtype=jnp.float32)
    params = (W1, b1, wt, W2, b2)

    loss = jax.block_until_ready(ddpm_forward_pallas(x, eps, t, alpha_t, n_T, params))
    loss_ref = ddpm_forward_ref(x, eps, t, alpha_t, n_T, params)
    assert jnp.allclose(loss, loss_ref, rtol=1e-4, atol=1e-5), (loss, loss_ref)

    # TODO(synk): reverse-diffusion sample() loop is host-driven and not ported.
    print("KERNEL_OK")
</pallas_src>

<mosaic_0001>
module attributes {stable_mosaic.version = 11 : i64} {
  func.func @_ddpm_kernel(%arg0: memref<1x512xf32, #tpu.memory_space<vmem>>, %arg1: memref<1x512xf32, #tpu.memory_space<vmem>>, %arg2: memref<4x512xf32, #tpu.memory_space<vmem>>, %arg3: memref<4x512xf32, #tpu.memory_space<vmem>>, %arg4: memref<32x4xf32, #tpu.memory_space<vmem>>, %arg5: memref<32x512xf32, #tpu.memory_space<vmem>>, %arg6: memref<4x32xf32, #tpu.memory_space<vmem>>, %arg7: memref<4x1xf32, #tpu.memory_space<vmem>>, %arg8: memref<1x1xf32, #tpu.memory_space<vmem>>, %arg9: memref<1x1xf32, #tpu.memory_space<smem>>) attributes {dimension_semantics = [], scalar_prefetch = 0 : i64, scratch_operands = 0 : i64, tpu.core_type = #tpu.core_type<tc>} {
    %c0 = arith.constant 0 : index
    %c0_0 = arith.constant 0 : index
    %0 = vector.load %arg2[%c0, %c0_0] : memref<4x512xf32, #tpu.memory_space<vmem>>, vector<4x512xf32>
    %c0_1 = arith.constant 0 : index
    %c0_2 = arith.constant 0 : index
    %1 = vector.load %arg3[%c0_1, %c0_2] : memref<4x512xf32, #tpu.memory_space<vmem>>, vector<4x512xf32>
    %c0_3 = arith.constant 0 : index
    %c0_4 = arith.constant 0 : index
    %2 = vector.load %arg4[%c0_3, %c0_4] : memref<32x4xf32, #tpu.memory_space<vmem>>, vector<32x4xf32>
    %c0_5 = arith.constant 0 : index
    %c0_6 = arith.constant 0 : index
    %3 = vector.load %arg0[%c0_5, %c0_6] : memref<1x512xf32, #tpu.memory_space<vmem>>, vector<1x512xf32>
    %4 = vector.broadcast %3 : vector<1x512xf32> to vector<4x512xf32>
    %5 = arith.mulf %4, %0 : vector<4x512xf32>
    %c0_7 = arith.constant 0 : index
    %c0_8 = arith.constant 0 : index
    %6 = vector.load %arg1[%c0_7, %c0_8] : memref<1x512xf32, #tpu.memory_space<vmem>>, vector<1x512xf32>
    %7 = vector.broadcast %6 : vector<1x512xf32> to vector<4x512xf32>
    %8 = arith.mulf %7, %1 : vector<4x512xf32>
    %9 = arith.addf %5, %8 : vector<4x512xf32>
    %c0_9 = arith.constant 0 : index
    %c0_10 = arith.constant 0 : index
    %10 = vector.load %arg5[%c0_9, %c0_10] : memref<32x512xf32, #tpu.memory_space<vmem>>, vector<32x512xf32>
    %11 = vector.extract_strided_slice %2 {offsets = [0, 0], sizes = [32, 1], strides = [1, 1]} : vector<32x4xf32> to vector<32x1xf32>
    %12 = vector.extract_strided_slice %9 {offsets = [0, 0], sizes = [1, 512], strides = [1, 1]} : vector<4x512xf32> to vector<1x512xf32>
    %13 = vector.broadcast %11 : vector<32x1xf32> to vector<32x512xf32>
    %14 = vector.broadcast %12 : vector<1x512xf32> to vector<32x512xf32>
    %15 = arith.mulf %13, %14 : vector<32x512xf32>
    %16 = arith.addf %10, %15 : vector<32x512xf32>
    %17 = vector.extract_strided_slice %2 {offsets = [0, 1], sizes = [32, 1], strides = [1, 1]} : vector<32x4xf32> to vector<32x1xf32>
    %18 = vector.extract_strided_slice %9 {offsets = [1, 0], sizes = [1, 512], strides = [1, 1]} : vector<4x512xf32> to vector<1x512xf32>
    %19 = vector.broadcast %17 : vector<32x1xf32> to vector<32x512xf32>
    %20 = vector.broadcast %18 : vector<1x512xf32> to vector<32x512xf32>
    %21 = arith.mulf %19, %20 : vector<32x512xf32>
    %22 = arith.addf %16, %21 : vector<32x512xf32>
    %23 = vector.extract_strided_slice %2 {offsets = [0, 2], sizes = [32, 1], strides = [1, 1]} : vector<32x4xf32> to vector<32x1xf32>
    %24 = vector.extract_strided_slice %9 {offsets = [2, 0], sizes = [1, 512], strides = [1, 1]} : vector<4x512xf32> to vector<1x512xf32>
    %25 = vector.broadcast %23 : vector<32x1xf32> to vector<32x512xf32>
    %26 = vector.broadcast %24 : vector<1x512xf32> to vector<32x512xf32>
    %27 = arith.mulf %25, %26 : vector<32x512xf32>
    %28 = arith.addf %22, %27 : vector<32x512xf32>
    %29 = vector.extract_strided_slice %2 {offsets = [0, 3], sizes = [32, 1], strides = [1, 1]} : vector<32x4xf32> to vector<32x1xf32>
    %30 = vector.extract_strided_slice %9 {offsets = [3, 0], sizes = [1, 512], strides = [1, 1]} : vector<4x512xf32> to vector<1x512xf32>
    %31 = vector.broadcast %29 : vector<32x1xf32> to vector<32x512xf32>
    %32 = vector.broadcast %30 : vector<1x512xf32> to vector<32x512xf32>
    %33 = arith.mulf %31, %32 : vector<32x512xf32>
    %34 = arith.addf %28, %33 : vector<32x512xf32>
    %cst = arith.constant 0.000000e+00 : f32
    %35 = vector.broadcast %cst : f32 to vector<32x512xf32>
    %36 = arith.maximumf %34, %35 : vector<32x512xf32>
    %c0_11 = arith.constant 0 : index
    %c0_12 = arith.constant 0 : index
    %37 = vector.load %arg6[%c0_11, %c0_12] : memref<4x32xf32, #tpu.memory_space<vmem>>, vector<4x32xf32>
    %cst_13 = arith.constant dense<0.000000e+00> : vector<4x512xf32>
    %38 = tpu.matmul %37, %36, %cst_13 {dimension_numbers = #tpu.dot_dimension_numbers<[1], [0], [0], [1], [0, 0, 1, 1], [], []>} : vector<4x32xf32>, vector<32x512xf32>, vector<4x512xf32> -> vector<4x512xf32>
    %c0_14 = arith.constant 0 : index
    %c0_15 = arith.constant 0 : index
    %39 = vector.load %arg7[%c0_14, %c0_15] : memref<4x1xf32, #tpu.memory_space<vmem>>, vector<4x1xf32>
    %40 = vector.broadcast %39 : vector<4x1xf32> to vector<4x512xf32>
    %41 = arith.addf %38, %40 : vector<4x512xf32>
    %42 = arith.subf %41, %1 : vector<4x512xf32>
    %43 = arith.mulf %42, %42 : vector<4x512xf32>
    %44 = vector.shape_cast %43 : vector<4x512xf32> to vector<1x4x512xf32>
    %cst_16 = arith.constant dense<0.000000e+00> : vector<1xf32>
    %45 = vector.multi_reduction <add>, %44, %cst_16 [1, 2] : vector<1x4x512xf32> to vector<1xf32>
    %46 = vector.shape_cast %45 : vector<1xf32> to vector<1x1x1xf32>
    %47 = vector.extract %46[0, 0, 0] : f32 from vector<1x1x1xf32>
    %cst_17 = arith.constant 2.048000e+03 : f32
    %48 = arith.divf %47, %cst_17 : f32
    %c0_18 = arith.constant 0 : index
    %c0_19 = arith.constant 0 : index
    %49 = memref.load %arg9[%c0_18, %c0_19] : memref<1x1xf32, #tpu.memory_space<smem>>
    memref.store %48, %arg9[%c0_18, %c0_19] : memref<1x1xf32, #tpu.memory_space<smem>>
    return
  }
}

</mosaic_0001>

<llo_original>
// kernel: tpu_custom_call.1
$region0: #{tpu_custom_call.1}
  #allocation0 [shape = 'u32[]', space=smem, size = 0x4, offset = 0x4, fixed_abs, tag = 'smem constant byte address 0x4 - core index']
  #allocation1 [shape = 'u32[144,128]{1,0:T(1,128)}', space=vmem, size = 0x12000, scoped, tag = 'internal scratch']
  #allocation2 [shape = 'f32[1,1]{1,0:T(1,128)S(1)}', space=vmem, size = 0x200, scoped, tag = 'scoped memory for tpu_custom_call.1']
  %s0 = inlined_call_operand.vmem [shape: f32[1,512], index: 0, kind: input, shape index: {}]
  %s1 = inlined_call_operand.vmem [shape: f32[1,512], index: 1, kind: input, shape index: {}]
  %s2 = inlined_call_operand.vmem [shape: f32[4,512], index: 2, kind: input, shape index: {}]
  %s3 = inlined_call_operand.vmem [shape: f32[4,512], index: 3, kind: input, shape index: {}]
  %s4 = inlined_call_operand.vmem [shape: f32[32,4], index: 4, kind: input, shape index: {}]
  %s5 = inlined_call_operand.hbm [shape: f32[32,512], index: 5, kind: input, shape index: {}]
  %s6 = inlined_call_operand.vmem [shape: f32[4,32], index: 6, kind: input, shape index: {}]
  %s7 = inlined_call_operand.vmem [shape: f32[4,1], index: 7, kind: input, shape index: {}]
  %s8 = inlined_call_operand.<no memory space> [shape: f32[1,1], index: 8, kind: input, shape index: {}]
  %s9 = inlined_call_operand.hbm [shape: f32[1,1], index: 9, kind: output, shape index: {}]
  %s10 = sld [smem:[#allocation0]]
  $region50: #{tpu_custom_call.1} parent=0
    _
  %s12 = ssub.s32 1, %s10
  %s13 = scalar_select 0, %s12, %s10
  %v14 = vstv %s8
  %15 = vst [vmem:[#allocation2] sm:$0x1] %v14
  $region1: #{tpu_custom_call.1} parent=0
    #allocation3 [shape = 'u8[65536]{0}', space=vmem, size = 0x10000, scoped, tag = 'input window, operand 5, single buffered']
    #allocation4 [shape = 's32[1]{0}', space=sflag, size = 0x4, scoped, tag = 'scoped memory for tpu_custom_call.1']
    #allocation5 [shape = 's32[1]{0}', space=sflag, size = 0x4, scoped, tag = 'scoped memory for tpu_custom_call.1']
    #allocation6 [shape = 'u8[512]{0}', space=smem, size = 0x200, scoped, tag = 'output window, operand 0, single buffered']
    %16 = vsyncpa [#allocation4], 0
    %17 = vsyncpa [#allocation5], 0
    // Predicated region
    $region2: #{tpu_custom_call.1} parent=1 // pred_check
      _
    $region3: #{tpu_custom_call.1} parent=1 // pred_check_branch
      %19 = sbr.rel (0) target = $region5
    $region4: #{tpu_custom_call.1} parent=1 // pred_region
      _
    $region5: #{tpu_custom_call.1} parent=1 // pred_fallthru
      _
    // Predicated region
    $region6: #{tpu_custom_call.1} parent=1 // pred_check
      _
    $region7: #{tpu_custom_call.1} parent=1 // pred_check_branch
      %21 = sbr.rel (0) target = $region9
    $region8: #{tpu_custom_call.1} parent=1 // pred_region
      _
    $region9: #{tpu_custom_call.1} parent=1 // pred_fallthru
      _
    // Predicated region
    $region10: #{tpu_custom_call.1} parent=1 // pred_check
      _
    $region11: #{tpu_custom_call.1} parent=1 // pred_check_branch
      %23 = sbr.rel (0) target = $region13
    $region12: #{tpu_custom_call.1} parent=1 // pred_region
      _
    $region13: #{tpu_custom_call.1} parent=1 // pred_fallthru
      _
    // Predicated region
    $region14: #{tpu_custom_call.1} parent=1 // pred_check
      _
    $region15: #{tpu_custom_call.1} parent=1 // pred_check_branch
      %25 = sbr.rel (0) target = $region17
    $region16: #{tpu_custom_call.1} parent=1 // pred_region
      _
    $region17: #{tpu_custom_call.1} parent=1 // pred_fallthru
      _
    // Predicated region
    $region18: #{tpu_custom_call.1} parent=1 // pred_check
      _
    $region19: #{tpu_custom_call.1} parent=1 // pred_check_branch
      %27 = sbr.rel (0) target = $region21
    $region20: #{tpu_custom_call.1} parent=1 // pred_region
      _
    $region21: #{tpu_custom_call.1} parent=1 // pred_fallthru
      _
    // Predicated region
    $region22: #{tpu_custom_call.1} parent=1 // pred_check
      _
    $region23: #{tpu_custom_call.1} parent=1 // pred_check_branch
      %29 = sbr.rel (0) target = $region25
    $region24: #{tpu_custom_call.1} parent=1 // pred_region
      %s31 = ssub.s32 2048, 2048
      %32 = vsyncadd [#allocation4], %s31
      %s33 = sshll.u32 [#allocation3], 4
      %s34 = int_to_ptr.vmem [resolvable:$true] %s33
      %39 = dma.hbm_to_vmem [thread:$0]  %s5, 2048, %s34, [#allocation4], 512, 512, 32
    $region25: #{tpu_custom_call.1} parent=1 // pred_fallthru
      _
    // Predicated region
    $region26: #{tpu_custom_call.1} parent=1 // pred_check
      _
    $region27: #{tpu_custom_call.1} parent=1 // pred_check_branch
      %41 = sbr.rel (0) target = $region29
    $region28: #{tpu_custom_call.1} parent=1 // pred_region
      _
    $region29: #{tpu_custom_call.1} parent=1 // pred_fallthru
      _
    // Predicated region
    $region30: #{tpu_custom_call.1} parent=1 // pred_check
      _
    $region31: #{tpu_custom_call.1} parent=1 // pred_check_branch
      %43 = sbr.rel (0) target = $region33
    $region32: #{tpu_custom_call.1} parent=1 // pred_region
      _
    $region33: #{tpu_custom_call.1} parent=1 // pred_fallthru
      _
    // Predicated region
    $region34: #{tpu_custom_call.1} parent=1 // pred_check
      _
    $region35: #{tpu_custom_call.1} parent=1 // pred_check_branch
      %45 = sbr.rel (0) target = $region37
    $region36: #{tpu_custom_call.1} parent=1 // pred_region
      _
    $region37: #{tpu_custom_call.1} parent=1 // pred_fallthru
      _
    // Predicated region
    $region38: #{tpu_custom_call.1} parent=1 // pred_check
      _
    $region39: #{tpu_custom_call.1} parent=1 // pred_check_branch
      %47 = sbr.rel (0) target = $region41
    $region40: #{tpu_custom_call.1} parent=1 // pred_region
      %48 = dma.done [#allocation4], 2048
    $region41: #{tpu_custom_call.1} parent=1 // pred_fallthru
      _
    %v49 = vld [vmem:[%s2] sm:$0xff]
    %v50 = vld [vmem:[%s2 + $0x8] sm:$0xff]
    %v51 = vld [vmem:[%s3] sm:$0xff]
    %v52 = vld [vmem:[%s3 + $0x8] sm:$0xff]
    %v53 = vld [vmem:[%s4] sm:$0xff]
    %v54 = vld [vmem:[%s4 + $0x8] sm:$0xff]
    %v55 = vld [vmem:[%s4 + $0x10] sm:$0xff]
    %v56 = vld [vmem:[%s4 + $0x18] sm:$0xff]
    %v57 = vld [vmem:[%s0] sm:$0xf]
    %v59 = vlaneseq
    %v60 = vshrl.u32 %v59, 7
    %v61 = vsub.s32 0, %v60
    %v62 = vrot.slane %v57, %v61
    %v63 = vlaneseq
    %v64 = vshrl.u32 %v63, 7
    %v65 = vsub.s32 1, %v64
    %v66 = vrot.slane %v57, %v65
    %v67 = vlaneseq
    %v68 = vshrl.u32 %v67, 7
    %v69 = vsub.s32 2, %v68
    %v70 = vrot.slane %v57, %v69
    %v71 = vlaneseq
    %v72 = vshrl.u32 %v71, 7
    %v73 = vsub.s32 3, %v72
    %v74 = vrot.slane %v57, %v73
    %v81 = vcombine.high %v49, %v49
    %v82 = vcombine.high %v50, %v50
    %v85 = vmul.f32 %v62, %v49
    %v86 = vmul.f32 %v66, %v81
    %v87 = vmul.f32 %v70, %v50
    %v88 = vmul.f32 %v74, %v82
    %v89 = vld [vmem:[%s1] sm:$0xf]
    %v91 = vlaneseq
    %v92 = vshrl.u32 %v91, 7
    %v93 = vsub.s32 0, %v92
    %v94 = vrot.slane %v89, %v93
    %v95 = vlaneseq
    %v96 = vshrl.u32 %v95, 7
    %v97 = vsub.s32 1, %v96
    %v98 = vrot.slane %v89, %v97
    %v99 = vlaneseq
    %v100 = vshrl.u32 %v99, 7
    %v101 = vsub.s32 2, %v100
    %v102 = vrot.slane %v89, %v101
    %v103 = vlaneseq
    %v104 = vshrl.u32 %v103, 7
    %v105 = vsub.s32 3, %v104
    %v106 = vrot.slane %v89, %v105
    %v113 = vcombine.high %v51, %v51
    %v114 = vcombine.high %v52, %v52
    %v117 = vmul.f32 %v94, %v51
    %v118 = vmul.f32 %v98, %v113
    %v119 = vmul.f32 %v102, %v52
    %v120 = vmul.f32 %v106, %v114
    %v121 = vadd.f32 %v85, %v117
    %v122 = vadd.f32 %v86, %v118
    %v123 = vadd.f32 %v87, %v119
    %v124 = vadd.f32 %v88, %v120
    %v125 = vld [vmem:[#allocation3] sm:$0xff]
    %v126 = vld [vmem:[#allocation3 + $0x8] sm:$0xff]
    %v127 = vld [vmem:[#allocation3 + $0x10] sm:$0xff]
    %v128 = vld [vmem:[#allocation3 + $0x18] sm:$0xff]
    %v129 = vld [vmem:[#allocation3 + $0x20] sm:$0xff]
    %v130 = vld [vmem:[#allocation3 + $0x28] sm:$0xff]
    %v131 = vld [vmem:[#allocation3 + $0x30] sm:$0xff]
    %v132 = vld [vmem:[#allocation3 + $0x38] sm:$0xff]
    %v133 = vld [vmem:[#allocation3 + $0x40] sm:$0xff]
    %v134 = vld [vmem:[#allocation3 + $0x48] sm:$0xff]
    %v135 = vld [vmem:[#allocation3 + $0x50] sm:$0xff]
    %v136 = vld [vmem:[#allocation3 + $0x58] sm:$0xff]
    %v137 = vld [vmem:[#allocation3 + $0x60] sm:$0xff]
    %v138 = vld [vmem:[#allocation3 + $0x68] sm:$0xff]
    %v139 = vld [vmem:[#allocation3 + $0x70] sm:$0xff]
    %v140 = vld [vmem:[#allocation3 + $0x78] sm:$0xff]
    %142 = vset.pattern.permute.xlu0 0
    %143 = vperm.xlu0 %142, %v53
    %v144 = vpop.permute.xlu0 %143
    %147 = vset.pattern.permute.xlu0 0
    %148 = vperm.xlu0 %147, %v54
    %v149 = vpop.permute.xlu0 %148
    %152 = vset.pattern.permute.xlu0 0
    %153 = vperm.xlu0 %152, %v55
    %v154 = vpop.permute.xlu0 %153
    %157 = vset.pattern.permute.xlu0 0
    %158 = vperm.xlu0 %157, %v56
    %v159 = vpop.permute.xlu0 %158
    %v161 = vlaneseq
    %v162 = vshrl.u32 %v161, 7
    %v163 = vsub.s32 0, %v162
    %v164 = vrot.slane %v121, %v163
    %v165 = vlaneseq
    %v166 = vshrl.u32 %v165, 7
    %v167 = vsub.s32 0, %v166
    %v168 = vrot.slane %v122, %v167
    %v169 = vlaneseq
    %v170 = vshrl.u32 %v169, 7
    %v171 = vsub.s32 0, %v170
    %v172 = vrot.slane %v123, %v171
    %v173 = vlaneseq
    %v174 = vshrl.u32 %v173, 7
    %v175 = vsub.s32 0, %v174
    %v176 = vrot.slane %v124, %v175
    %v177 = vmul.f32 %v144, %v164
    %v178 = vmul.f32 %v144, %v168
    %v179 = vmul.f32 %v144, %v172
    %v180 = vmul.f32 %v144, %v176
    %v181 = vmul.f32 %v149, %v164
    %v182 = vmul.f32 %v149, %v168
    %v183 = vmul.f32 %v149, %v172
    %v184 = vmul.f32 %v149, %v176
    %v185 = vmul.f32 %v154, %v164
    %v186 = vmul.f32 %v154, %v168
    %v187 = vmul.f32 %v154, %v172
    %v188 = vmul.f32 %v154, %v176
    %v189 = vmul.f32 %v159, %v164
    %v190 = vmul.f32 %v159, %v168
    %v191 = vmul.f32 %v159, %v172
    %v192 = vmul.f32 %v159, %v176
    %v193 = vadd.f32 %v125, %v177
    %v194 = vadd.f32 %v126, %v178
    %v195 = vadd.f32 %v127, %v179
    %v196 = vadd.f32 %v128, %v180
    %v197 = vadd.f32 %v129, %v181
    %v198 = vadd.f32 %v130, %v182
    %v199 = vadd.f32 %v131, %v183
    %v200 = vadd.f32 %v132, %v184
    %v201 = vadd.f32 %v133, %v185
    %v202 = vadd.f32 %v134, %v186
    %v203 = vadd.f32 %v135, %v187
    %v204 = vadd.f32 %v136, %v188
    %v205 = vadd.f32 %v137, %v189
    %v206 = vadd.f32 %v138, %v190
    %v207 = vadd.f32 %v139, %v191
    %v208 = vadd.f32 %v140, %v192
    %209 = vset.pattern.permute.xlu0 1
    %210 = vperm.xlu0 %209, %v53
    %v211 = vpop.permute.xlu0 %210
    %213 = vset.pattern.permute.xlu0 1
    %214 = vperm.xlu0 %213, %v54
    %v215 = vpop.permute.xlu0 %214
    %217 = vset.pattern.permute.xlu0 1
    %218 = vperm.xlu0 %217, %v55
    %v219 = vpop.permute.xlu0 %218
    %221 = vset.pattern.permute.xlu0 1
    %222 = vperm.xlu0 %221, %v56
    %v223 = vpop.permute.xlu0 %222
    %v225 = vlaneseq
    %v226 = vshrl.u32 %v225, 7
    %v227 = vsub.s32 1, %v226
    %v228 = vrot.slane %v121, %v227
    %v229 = vlaneseq
    %v230 = vshrl.u32 %v229, 7
    %v231 = vsub.s32 1, %v230
    %v232 = vrot.slane %v122, %v231
    %v233 = vlaneseq
    %v234 = vshrl.u32 %v233, 7
    %v235 = vsub.s32 1, %v234
    %v236 = vrot.slane %v123, %v235
    %v237 = vlaneseq
    %v238 = vshrl.u32 %v237, 7
    %v239 = vsub.s32 1, %v238
    %v240 = vrot.slane %v124, %v239
    %v241 = vmul.f32 %v211, %v228
    %v242 = vmul.f32 %v211, %v232
    %v243 = vmul.f32 %v211, %v236
    %v244 = vmul.f32 %v211, %v240
    %v245 = vmul.f32 %v215, %v228
    %v246 = vmul.f32 %v215, %v232
    %v247 = vmul.f32 %v215, %v236
    %v248 = vmul.f32 %v215, %v240
    %v249 = vmul.f32 %v219, %v228
    %v250 = vmul.f32 %v219, %v232
    %v251 = vmul.f32 %v219, %v236
    %v252 = vmul.f32 %v219, %v240
    %v253 = vmul.f32 %v223, %v228
    %v254 = vmul.f32 %v223, %v232
    %v255 = vmul.f32 %v223, %v236
    %v256 = vmul.f32 %v223, %v240
    %v257 = vadd.f32 %v193, %v241
    %v258 = vadd.f32 %v194, %v242
    %v259 = vadd.f32 %v195, %v243
    %v260 = vadd.f32 %v196, %v244
    %v261 = vadd.f32 %v197, %v245
    %v262 = vadd.f32 %v198, %v246
    %v263 = vadd.f32 %v199, %v247
    %v264 = vadd.f32 %v200, %v248
    %v265 = vadd.f32 %v201, %v249
    %v266 = vadd.f32 %v202, %v250
    %v267 = vadd.f32 %v203, %v251
    %v268 = vadd.f32 %v204, %v252
    %v269 = vadd.f32 %v205, %v253
    %v270 = vadd.f32 %v206, %v254
    %v271 = vadd.f32 %v207, %v255
    %v272 = vadd.f32 %v208, %v256
    %273 = vset.pattern.permute.xlu0 2
    %274 = vperm.xlu0 %273, %v53
    %v275 = vpop.permute.xlu0 %274
    %277 = vset.pattern.permute.xlu0 2
    %278 = vperm.xlu0 %277, %v54
    %v279 = vpop.permute.xlu0 %278
    %281 = vset.pattern.permute.xlu0 2
    %282 = vperm.xlu0 %281, %v55
    %v283 = vpop.permute.xlu0 %282
    %285 = vset.pattern.permute.xlu0 2
    %286 = vperm.xlu0 %285, %v56
    %v287 = vpop.permute.xlu0 %286
    %v289 = vlaneseq
    %v290 = vshrl.u32 %v289, 7
    %v291 = vsub.s32 2, %v290
    %v292 = vrot.slane %v121, %v291
    %v293 = vlaneseq
    %v294 = vshrl.u32 %v293, 7
    %v295 = vsub.s32 2, %v294
    %v296 = vrot.slane %v122, %v295
    %v297 = vlaneseq
    %v298 = vshrl.u32 %v297, 7
    %v299 = vsub.s32 2, %v298
    %v300 = vrot.slane %v123, %v299
    %v301 = vlaneseq
    %v302 = vshrl.u32 %v301, 7
    %v303 = vsub.s32 2, %v302
    %v304 = vrot.slane %v124, %v303
    %v305 = vmul.f32 %v275, %v292
    %v306 = vmul.f32 %v275, %v296
    %v307 = vmul.f32 %v275, %v300
    %v308 = vmul.f32 %v275, %v304
    %v309 = vmul.f32 %v279, %v292
    %v310 = vmul.f32 %v279, %v296
    %v311 = vmul.f32 %v279, %v300
    %v312 = vmul.f32 %v279, %v304
    %v313 = vmul.f32 %v283, %v292
    %v314 = vmul.f32 %v283, %v296
    %v315 = vmul.f32 %v283, %v300
    %v316 = vmul.f32 %v283, %v304
    %v317 = vmul.f32 %v287, %v292
    %v318 = vmul.f32 %v287, %v296
    %v319 = vmul.f32 %v287, %v300
    %v320 = vmul.f32 %v287, %v304
    %v321 = vadd.f32 %v257, %v305
    %v322 = vadd.f32 %v258, %v306
    %v323 = vadd.f32 %v259, %v307
    %v324 = vadd.f32 %v260, %v308
    %v325 = vadd.f32 %v261, %v309
    %v326 = vadd.f32 %v262, %v310
    %v327 = vadd.f32 %v263, %v311
    %v328 = vadd.f32 %v264, %v312
    %v329 = vadd.f32 %v265, %v313
    %v330 = vadd.f32 %v266, %v314
    %v331 = vadd.f32 %v267, %v315
    %v332 = vadd.f32 %v268, %v316
    %v333 = vadd.f32 %v269, %v317
    %v334 = vadd.f32 %v270, %v318
    %v335 = vadd.f32 %v271, %v319
    %v336 = vadd.f32 %v272, %v320
    %337 = vset.pattern.permute.xlu0 3
    %338 = vperm.xlu0 %337, %v53
    %v339 = vpop.permute.xlu0 %338
    %341 = vset.pattern.permute.xlu0 3
    %342 = vperm.xlu0 %341, %v54
    %v343 = vpop.permute.xlu0 %342
    %345 = vset.pattern.permute.xlu0 3
    %346 = vperm.xlu0 %345, %v55
    %v347 = vpop.permute.xlu0 %346
    %349 = vset.pattern.permute.xlu0 3
    %350 = vperm.xlu0 %349, %v56
    %v351 = vpop.permute.xlu0 %350
    %v353 = vlaneseq
    %v354 = vshrl.u32 %v353, 7
    %v355 = vsub.s32 3, %v354
    %v356 = vrot.slane %v121, %v355
    %v357 = vlaneseq
    %v358 = vshrl.u32 %v357, 7
    %v359 = vsub.s32 3, %v358
    %v360 = vrot.slane %v122, %v359
    %v361 = vlaneseq
    %v362 = vshrl.u32 %v361, 7
    %v363 = vsub.s32 3, %v362
    %v364 = vrot.slane %v123, %v363
    %v365 = vlaneseq
    %v366 = vshrl.u32 %v365, 7
    %v367 = vsub.s32 3, %v366
    %v368 = vrot.slane %v124, %v367
    %v369 = vmul.f32 %v339, %v356
    %v370 = vmul.f32 %v339, %v360
    %v371 = vmul.f32 %v339, %v364
    %v372 = vmul.f32 %v339, %v368
    %v373 = vmul.f32 %v343, %v356
    %v374 = vmul.f32 %v343, %v360
    %v375 = vmul.f32 %v343, %v364
    %v376 = vmul.f32 %v343, %v368
    %v377 = vmul.f32 %v347, %v356
    %v378 = vmul.f32 %v347, %v360
    %v379 = vmul.f32 %v347, %v364
    %v380 = vmul.f32 %v347, %v368
    %v381 = vmul.f32 %v351, %v356
    %v382 = vmul.f32 %v351, %v360
    %v383 = vmul.f32 %v351, %v364
    %v384 = vmul.f32 %v351, %v368
    %v385 = vadd.f32 %v321, %v369
    %v386 = vadd.f32 %v322, %v370
    %v387 = vadd.f32 %v323, %v371
    %v388 = vadd.f32 %v324, %v372
    %v389 = vadd.f32 %v325, %v373
    %v390 = vadd.f32 %v326, %v374
    %v391 = vadd.f32 %v327, %v375
    %v392 = vadd.f32 %v328, %v376
    %v393 = vadd.f32 %v329, %v377
    %v394 = vadd.f32 %v330, %v378
    %v395 = vadd.f32 %v331, %v379
    %v396 = vadd.f32 %v332, %v380
    %v397 = vadd.f32 %v333, %v381
    %v398 = vadd.f32 %v334, %v382
    %v399 = vadd.f32 %v335, %v383
    %v400 = vadd.f32 %v336, %v384
    %v401 = vmax.f32 %v385, 0.0
    %v402 = vmax.f32 %v386, 0.0
    %v403 = vmax.f32 %v387, 0.0
    %v404 = vmax.f32 %v388, 0.0
    %v405 = vmax.f32 %v389, 0.0
    %v406 = vmax.f32 %v390, 0.0
    %v407 = vmax.f32 %v391, 0.0
    %v408 = vmax.f32 %v392, 0.0
    %v409 = vmax.f32 %v393, 0.0
    %v410 = vmax.f32 %v394, 0.0
    %v411 = vmax.f32 %v395, 0.0
    %v412 = vmax.f32 %v396, 0.0
    %v413 = vmax.f32 %v397, 0.0
    %v414 = vmax.f32 %v398, 0.0
    %v415 = vmax.f32 %v399, 0.0
    %v416 = vmax.f32 %v400, 0.0
    %v417 = vld [vmem:[%s6] sm:$0xf]
    %v418 = vld [vmem:[%s7] sm:$0xf]
    %420 = vset.pattern.permute.xlu0 0
    %421 = vperm.xlu0 %420, %v418
    %v422 = vpop.permute.xlu0 %421
    %vm424 = vcmask 261120
    %v426 = vsel %vm424, %v417, 0
    %428 = vmatprep.subr.mxu0 %v402
    %429 = vmatpush1.msra.mxu0 %v401
    %430 = vmatprep.subr.mxu0 %v406
    %431 = vmatpush1.msra.mxu0 %v405
    %432 = vmatprep.subr.mxu0 %v410
    %433 = vmatpush1.msra.mxu0 %v409
    %434 = vmatprep.subr.mxu0 %v414
    %435 = vmatpush1.msra.mxu0 %v413
    %436 = vmatprep.subr.mxu0 0.0
    %437 = vmatpush1.msra.mxu0 0.0
    %438 = vmatprep.subr.mxu0 0.0
    %439 = vmatpush1.msra.mxu0 0.0
    %440 = vmatprep.subr.mxu0 0.0
    %441 = vmatpush1.msra.mxu0 0.0
    %442 = vmatprep.subr.mxu0 0.0
    %443 = vmatpush1.msra.mxu0 0.0
    %444 = vmatprep.subr.mxu0 0.0
    %445 = vmatpush1.msra.mxu0 0.0
    %446 = vmatprep.subr.mxu0 0.0
    %447 = vmatpush1.msra.mxu0 0.0
    %448 = vmatprep.subr.mxu0 0.0
    %449 = vmatpush1.msra.mxu0 0.0
    %450 = vmatprep.subr.mxu0 0.0
    %451 = vmatpush1.msra.mxu0 0.0
    %452 = vmatprep.subr.mxu0 0.0
    %453 = vmatpush1.msra.mxu0 0.0
    %454 = vmatprep.subr.mxu0 0.0
    %455 = vmatpush1.msra.mxu0 0.0
    %456 = vmatprep.subr.mxu0 0.0
    %457 = vmatpush1.msra.mxu0 0.0
    %458 = vmatprep.subr.mxu0 0.0
    %459 = vmatpush1.msra.mxu0 0.0
    %460 = vmatprep.subr.mxu0 0.0
    %461 = vmatpush1.msra.mxu0 0.0
    %462 = vmatprep.subr.mxu0 0.0
    %463 = vmatpush1.msra.mxu0 0.0
    %464 = vmatprep.subr.mxu0 0.0
    %465 = vmatpush1.msra.mxu0 0.0
    %466 = vmatprep.subr.mxu0 0.0
    %467 = vmatpush1.msra.mxu0 0.0
    %468 = vmatprep.subr.mxu0 0.0
    %469 = vmatpush1.msra.mxu0 0.0
    %470 = vmatprep.subr.mxu0 0.0
    %471 = vmatpush1.msra.mxu0 0.0
    %472 = vmatprep.subr.mxu0 0.0
    %473 = vmatpush1.msra.mxu0 0.0
    %474 = vmatprep.subr.mxu0 0.0
    %475 = vmatpush1.msra.mxu0 0.0
    %476 = vmatprep.subr.mxu0 0.0
    %477 = vmatpush1.msra.mxu0 0.0
    %478 = vmatprep.subr.mxu0 0.0
    %479 = vmatpush1.msra.mxu0 0.0
    %480 = vmatprep.subr.mxu0 0.0
    %481 = vmatpush1.msra.mxu0 0.0
    %482 = vmatprep.subr.mxu0 0.0
    %483 = vmatpush1.msra.mxu0 0.0
    %484 = vmatprep.subr.mxu0 0.0
    %485 = vmatpush1.msra.mxu0 0.0
    %486 = vmatprep.subr.mxu0 0.0
    %487 = vmatpush1.msra.mxu0 0.0
    %488 = vmatprep.subr.mxu0 0.0
    %489 = vmatpush1.msra.mxu0 0.0
    %490 = vmatprep.subr.mxu0 0.0
    %491 = vmatpush1.msra.mxu0 0.0
    %492 = vmatprep.mubr.f32.mxu0 0.0
    %493 = vmatmul.mubr.f32.gmra.mrb[0].mxu0 %v426
    %v494 = vpop.f32.mrb[0].mxu0
    %v495 = vadd.f32 %v422, %v494
    %v496 = vpop.f32.mrb[0].mxu0
    %v497 = vadd.f32 %v422, %v496
    %498 = vdwg.mxu0
    %499 = vmatprep.subr.mxu0 %v404
    %500 = vmatpush1.msra.mxu0 %v403
    %501 = vmatprep.subr.mxu0 %v408
    %502 = vmatpush1.msra.mxu0 %v407
    %503 = vmatprep.subr.mxu0 %v412
    %504 = vmatpush1.msra.mxu0 %v411
    %505 = vmatprep.subr.mxu0 %v416
    %506 = vmatpush1.msra.mxu0 %v415
    %507 = vmatprep.subr.mxu0 0.0
    %508 = vmatpush1.msra.mxu0 0.0
    %509 = vmatprep.subr.mxu0 0.0
    %510 = vmatpush1.msra.mxu0 0.0
    %511 = vmatprep.subr.mxu0 0.0
    %512 = vmatpush1.msra.mxu0 0.0
    %513 = vmatprep.subr.mxu0 0.0
    %514 = vmatpush1.msra.mxu0 0.0
    %515 = vmatprep.subr.mxu0 0.0
    %516 = vmatpush1.msra.mxu0 0.0
    %517 = vmatprep.subr.mxu0 0.0
    %518 = vmatpush1.msra.mxu0 0.0
    %519 = vmatprep.subr.mxu0 0.0
    %520 = vmatpush1.msra.mxu0 0.0
    %521 = vmatprep.subr.mxu0 0.0
    %522 = vmatpush1.msra.mxu0 0.0
    %523 = vmatprep.subr.mxu0 0.0
    %524 = vmatpush1.msra.mxu0 0.0
    %525 = vmatprep.subr.mxu0 0.0
    %526 = vmatpush1.msra.mxu0 0.0
    %527 = vmatprep.subr.mxu0 0.0
    %528 = vmatpush1.msra.mxu0 0.0
    %529 = vmatprep.subr.mxu0 0.0
    %530 = vmatpush1.msra.mxu0 0.0
    %531 = vmatprep.subr.mxu0 0.0
    %532 = vmatpush1.msra.mxu0 0.0
    %533 = vmatprep.subr.mxu0 0.0
    %534 = vmatpush1.msra.mxu0 0.0
    %535 = vmatprep.subr.mxu0 0.0
    %536 = vmatpush1.msra.mxu0 0.0
    %537 = vmatprep.subr.mxu0 0.0
    %538 = vmatpush1.msra.mxu0 0.0
    %539 = vmatprep.subr.mxu0 0.0
    %540 = vmatpush1.msra.mxu0 0.0
    %541 = vmatprep.subr.mxu0 0.0
    %542 = vmatpush1.msra.mxu0 0.0
    %543 = vmatprep.subr.mxu0 0.0
    %544 = vmatpush1.msra.mxu0 0.0
    %545 = vmatprep.subr.mxu0 0.0
    %546 = vmatpush1.msra.mxu0 0.0
    %547 = vmatprep.subr.mxu0 0.0
    %548 = vmatpush1.msra.mxu0 0.0
    %549 = vmatprep.subr.mxu0 0.0
    %550 = vmatpush1.msra.mxu0 0.0
    %551 = vmatprep.subr.mxu0 0.0
    %552 = vmatpush1.msra.mxu0 0.0
    %553 = vmatprep.subr.mxu0 0.0
    %554 = vmatpush1.msra.mxu0 0.0
    %555 = vmatprep.subr.mxu0 0.0
    %556 = vmatpush1.msra.mxu0 0.0
    %557 = vmatprep.subr.mxu0 0.0
    %558 = vmatpush1.msra.mxu0 0.0
    %559 = vmatprep.subr.mxu0 0.0
    %560 = vmatpush1.msra.mxu0 0.0
    %561 = vmatprep.subr.mxu0 0.0
    %562 = vmatpush1.msra.mxu0 0.0
    %563 = vmatprep.mubr.f32.mxu0 0.0
    %564 = vmatmul.mubr.f32.gmra.mrb[0].mxu0 %v426
    %v565 = vpop.f32.mrb[0].mxu0
    %v566 = vadd.f32 %v422, %v565
    %v567 = vpop.f32.mrb[0].mxu0
    %v568 = vadd.f32 %v422, %v567
    %569 = vdwg.mxu0
    %v570 = vsub.f32 %v495, %v51
    %v571 = vsub.f32 %v497, %v113
    %v572 = vsub.f32 %v566, %v52
    %v573 = vsub.f32 %v568, %v114
    %v574 = vmul.f32 %v570, %v570
    %v575 = vmul.f32 %v571, %v571
    %v576 = vmul.f32 %v572, %v572
    %v577 = vmul.f32 %v573, %v573
    %vm578 = vcmask 1043456
    %v579 = vsel %vm578, %v574, 0.0
    %v580 = vsel %vm578, %v575, 0.0
    %v581 = vadd.f32 %v579, %v580
    %v582 = vsel %vm578, %v576, 0.0
    %v583 = vadd.f32 %v581, %v582
    %v584 = vsel %vm578, %v577, 0.0
    %v585 = vadd.f32 %v583, %v584
    %586 = vadd.xlane.f32.xlu0 %v585
    %v587 = vpop.xlane.xlu0 %586
    %v588 = vrot.slane %v587, 4
    %v589 = vadd.f32 %v587, %v588
    %v590 = vrot.slane %v589, 2
    %v591 = vadd.f32 %v589, %v590
    %v592 = vrot.slane %v591, 1
    %v593 = vadd.f32 %v591, %v592
    %s594 = vtos %v593
    %v595 = vrcp.pop 2048.0
    %s596 = vtos %v595
    %s597 = smul.f32 %s594, %s596
    %s598 = scalar_lea.smem [#allocation6], 0
    %599 = sst [smem:[%s598]] %s597
    // Predicated region
    $region42: #{tpu_custom_call.1} parent=1 // pred_check
      _
    $region43: #{tpu_custom_call.1} parent=1 // pred_check_branch
      %601 = sbr.rel (0) target = $region45
    $region44: #{tpu_custom_call.1} parent=1 // pred_region
      %s603 = ssub.s32 16, 16
      %604 = vsyncadd [#allocation5], %s603
      %607 = dma.smem_to_hbm [#allocation6], 16, %s9, [#allocation5]
    $region45: #{tpu_custom_call.1} parent=1 // pred_fallthru
      _
    // Predicated region
    $region46: #{tpu_custom_call.1} parent=1 // pred_check
      _
    $region47: #{tpu_custom_call.1} parent=1 // pred_check_branch
      %609 = sbr.rel (0) target = $region49
    $region48: #{tpu_custom_call.1} parent=1 // pred_region
      %610 = dma.done [#allocation5], 16
    $region49: #{tpu_custom_call.1} parent=1 // pred_fallthru
      _
    %611 = sfence
    %612 = vsyncpa [#allocation4], 1
    %613 = vsyncpa [#allocation5], 1

</llo_original>
